<compile_context>
chip_gen: v7x
topology: tpu7x:2x2x1
jax: 0.10.0
libtpu: 0.0.40
codegen_flags: <defaults>
</compile_context>

<pallas_src>
import math

import jax
import jax.numpy as jnp
from jax.experimental import pallas as pl
from jax.experimental.pallas import tpu as pltpu


# ----------------------------------------------------------------------------
# helpers
# ----------------------------------------------------------------------------
def _pick_tile(dim, candidates):
    """Largest candidate that divides `dim`; else the full dim (always legal)."""
    for c in candidates:
        if c <= dim and dim % c == 0:
            return c
    return dim


# ----------------------------------------------------------------------------
# Kernel factory: block-wise / dense matmul (+ optional fused bias)
#   x2 : (B, nb*K)   -- free reshape of (B, nb, K), no transpose
#   w3 : (nb, K, N)
#   b  : (nb, N) or None
#   out: (B, nb*N)   -- lane-dense, free reshape back to (B, nb, N)
# ----------------------------------------------------------------------------
def _make_linear_kernel(has_bias, single_k):
    def kernel(*refs):
        if has_bias:
            x_ref, w_ref, b_ref, o_ref = refs[:4]
            scratch = refs[4:]
        else:
            x_ref, w_ref, o_ref = refs[:3]
            scratch = refs[3:]

        part = jnp.dot(x_ref[...], w_ref[0], preferred_element_type=jnp.float32)

        if single_k:                       # K fits in one tile: no scratch round-trip
            out = part
            if has_bias:
                out = out + b_ref[0]
            o_ref[...] = out.astype(o_ref.dtype)
        else:
            (acc_ref,) = scratch
            k = pl.program_id(3)

            @pl.when(k == 0)
            def _():
                acc_ref[...] = jnp.zeros_like(acc_ref)

            acc_ref[...] += part

            @pl.when(k == pl.num_programs(3) - 1)
            def _():
                out = acc_ref[...]
                if has_bias:
                    out = out + b_ref[0]
                o_ref[...] = out.astype(o_ref.dtype)

    return kernel


def blockwise_linear(x2, w3, bias=None):
    """out[:, n*N:(n+1)*N] = x2[:, n*K:(n+1)*K] @ w3[n] (+ bias[n])."""
    B, KF = x2.shape
    nb, K, N = w3.shape
    assert KF == nb * K

    tm = _pick_tile(B, (512, 256, 128, 64, 32, 16, 8))
    tk = _pick_tile(K, (512, 256, 128))     # multiple of 128, or full K (nb==1 case)
    tn = _pick_tile(N, (512, 256, 128))
    kblocks = K // tk
    nblocks = N // tn
    grid = (nb, B // tm, nblocks, kblocks)
    single_k = kblocks == 1
    has_bias = bias is not None

    in_specs = [
        pl.BlockSpec((tm, tk), lambda n, i, j, k: (i, n * kblocks + k)),
        pl.BlockSpec((1, tk, tn), lambda n, i, j, k: (n, k, j)),
    ]
    args = [x2, w3]
    if has_bias:
        b3 = bias.reshape(nb, 1, N)
        in_specs.append(pl.BlockSpec((1, 1, tn), lambda n, i, j, k: (n, 0, j)))
        args.append(b3)

    out_spec = pl.BlockSpec((tm, tn), lambda n, i, j, k: (i, n * nblocks + j))
    scratch = [] if single_k else [pltpu.VMEM((tm, tn), jnp.float32)]

    return pl.pallas_call(
        _make_linear_kernel(has_bias, single_k),
        out_shape=jax.ShapeDtypeStruct((B, nb * N), x2.dtype),
        grid_spec=pltpu.PrefetchScalarGridSpec(
            num_scalar_prefetch=0,
            grid=grid,
            in_specs=in_specs,
            out_specs=out_spec,
            scratch_shapes=scratch,
        ),
        compiler_params=pltpu.CompilerParams(
            dimension_semantics=("parallel", "parallel", "parallel", "arbitrary")),
    )(*args)


# ----------------------------------------------------------------------------
# Kernel: bias-only path  out = x + bias   (x: (B, nb, dout), bias: (nb, dout))
# ----------------------------------------------------------------------------
def _bias_add_kernel(x_ref, b_ref, o_ref):
    o_ref[...] = (x_ref[...] + b_ref[...]).astype(o_ref.dtype)


def bias_add(x, bias):
    assert x.ndim == 3 and bias.ndim == 2
    B, nb, dout = x.shape
    row_bytes = nb * dout * jnp.dtype(x.dtype).itemsize
    max_tb = max(1, (4 * 1024 * 1024) // max(1, row_bytes))   # ~4 MiB tiles
    tb = 1
    for c in (1024, 512, 256, 128, 64, 32, 16, 8, 4, 2, 1):
        if c <= B and c <= max_tb and B % c == 0:
            tb = c
            break
    return pl.pallas_call(
        _bias_add_kernel,
        out_shape=jax.ShapeDtypeStruct(x.shape, x.dtype),
        grid_spec=pltpu.PrefetchScalarGridSpec(
            num_scalar_prefetch=0,
            grid=(B // tb,),
            in_specs=[
                pl.BlockSpec((tb, nb, dout), lambda b: (b, 0, 0)),
                pl.BlockSpec((nb, dout), lambda b: (0, 0)),   # resident bias
            ],
            out_specs=pl.BlockSpec((tb, nb, dout), lambda b: (b, 0, 0)),
        ),
        compiler_params=pltpu.CompilerParams(dimension_semantics=("parallel",)),
    )(x, bias)


# ----------------------------------------------------------------------------
# Module wrapper (parameter setup = one-time plain-JAX glue)
# ----------------------------------------------------------------------------
class WeightPallas:
    def __init__(self, din, dout, num_blocks=None, bias=True, init=None,
                 use_bias_only=False, key=None):
        if key is None:
            key = jax.random.PRNGKey(0)
        self.num_blocks = num_blocks
        self.use_bias_only = use_bias_only
        self.din, self.dout = din, dout
        if init is None:
            init = 1.0 / math.sqrt(dout)
        kw, kb, kb2 = jax.random.split(key, 3)

        if num_blocks is None:
            # mirrors nn.Linear(din, dout, bias=bias); weight stored MXU-ready (din, dout)
            self.lin_w = jax.random.uniform(kw, (din, dout), jnp.float32, -init, init)
            self.lin_b = (jax.random.uniform(kb2, (dout,), jnp.float32, -init, init)
                          if bias else None)
            self.weight = None
            bias = False                     # mirrors the torch code
        else:
            self.weight = jax.random.uniform(
                kw, (num_blocks, din, dout), jnp.float32, -init, init)

        if bias is True:
            self.bias = jax.random.uniform(
                kb, (num_blocks, dout), jnp.float32, -init, init)
        else:
            self.bias = None

        # Same guard as the PyTorch module (use_bias_only requires a real bias).
        assert (use_bias_only and bias) or (not use_bias_only)

        # Block-path packing decision (one-time, at init):
        #  - lane-aligned din/dout (or nb==1): direct grid-over-blocks kernel.
        #  - small / unaligned dims: pack W block-diagonally so the forward is a
        #    single lane-dense (B, nb*din) @ (nb*din, nb*dout) matmul.
        if num_blocks is not None and not use_bias_only:
            lane_ok = (din % 128 == 0 and dout % 128 == 0) or num_blocks == 1
            self._use_blockdiag = not lane_ok
            if self._use_blockdiag:
                eye = jnp.eye(num_blocks, dtype=jnp.float32)
                w_bd = jnp.einsum('nac,nm->namc', self.weight, eye)
                self._w_packed = w_bd.reshape(1, num_blocks * din, num_blocks * dout)
                self._b_packed = (self.bias.reshape(1, num_blocks * dout)
                                  if self.bias is not None else None)

    def __call__(self, x):
        if self.use_bias_only:
            return bias_add(x, self.bias)

        if self.num_blocks is None:
            lead = x.shape[:-1]
            x2 = x.reshape(-1, self.din)
            b = None if self.lin_b is None else self.lin_b.reshape(1, self.dout)
            out = blockwise_linear(x2, self.lin_w[None], b)
            return out.reshape(*lead, self.dout)

        # block path: no permutes — only free reshapes around the kernel.
        assert x.ndim == 3
        B, nb, din = x.shape
        dout = self.dout
        x2 = x.reshape(B, nb * din)
        if self._use_blockdiag:
            out2 = blockwise_linear(x2, self._w_packed, self._b_packed)
        else:
            out2 = blockwise_linear(x2, self.weight, self.bias)
        return out2.reshape(B, nb, dout)


# ----------------------------------------------------------------------------
if __name__ == "__main__":
    B, nb, din, dout = 2, 4, 32, 32
    keys = jax.random.split(jax.random.PRNGKey(0), 8)

    # --- block path, small dims -> block-diagonal packed single matmul -------
    x_blk = jax.random.normal(keys[0], (B, nb, din), dtype=jnp.float32)
    m_blk = WeightPallas(din, dout, num_blocks=nb, bias=True, key=keys[1])
    out_blk = jax.block_until_ready(m_blk(x_blk))
    ref_blk = jnp.einsum("bnd,nde->bne", x_blk, m_blk.weight) + m_blk.bias
    assert out_blk.shape == (B, nb, dout)
    assert jnp.allclose(out_blk, ref_blk, atol=1e-4, rtol=1e-4)

    # --- block path, lane-aligned dims -> direct grid-over-blocks kernel -----
    B2, nb2, d2 = 8, 2, 128
    x_big = jax.random.normal(keys[2], (B2, nb2, d2), dtype=jnp.float32)
    m_big = WeightPallas(d2, d2, num_blocks=nb2, bias=True, key=keys[3])
    out_big = jax.block_until_ready(m_big(x_big))
    ref_big = jnp.einsum("bnd,nde->bne", x_big, m_big.weight) + m_big.bias
    assert jnp.allclose(out_big, ref_big, atol=1e-4, rtol=1e-4)

    # --- block path, bias=False -> bias-less kernel variant ------------------
    m_nob = WeightPallas(din, dout, num_blocks=nb, bias=False, key=keys[4])
    out_nob = jax.block_until_ready(m_nob(x_blk))
    ref_nob = jnp.einsum("bnd,nde->bne", x_blk, m_nob.weight)
    assert jnp.allclose(out_nob, ref_nob, atol=1e-4, rtol=1e-4)

    # --- dense path (num_blocks is None) -------------------------------------
    x_lin = jax.random.normal(keys[5], (B, din), dtype=jnp.float32)
    m_lin = WeightPallas(din, dout, num_blocks=None, bias=True, key=keys[6])
    out_lin = jax.block_until_ready(m_lin(x_lin))
    ref_lin = x_lin @ m_lin.lin_w + m_lin.lin_b
    assert out_lin.shape == (B, dout)
    assert jnp.allclose(out_lin, ref_lin, atol=1e-4, rtol=1e-4)

    # --- bias-only path -------------------------------------------------------
    x_bo = jax.random.normal(keys[7], (B, nb, dout), dtype=jnp.float32)
    m_bo = WeightPallas(din, dout, num_blocks=nb, bias=True,
                        use_bias_only=True, key=keys[1])
    out_bo = jax.block_until_ready(m_bo(x_bo))
    ref_bo = x_bo + m_bo.bias
    assert jnp.allclose(out_bo, ref_bo, atol=1e-6)

    print("KERNEL_OK")
</pallas_src>

<mosaic_0001>
module attributes {stable_mosaic.version = 11 : i64} {
  func.func @kernel(%arg0: i32, %arg1: i32, %arg2: i32, %arg3: i32, %arg4: memref<2x128xf32, #tpu.memory_space<vmem>>, %arg5: memref<1x128x128xf32, #tpu.memory_space<vmem>>, %arg6: memref<1x1x128xf32, #tpu.memory_space<vmem>>, %arg7: memref<2x128xf32, #tpu.memory_space<vmem>>) attributes {dimension_semantics = [#tpu.dimension_semantics<parallel>, #tpu.dimension_semantics<parallel>, #tpu.dimension_semantics<parallel>, #tpu.dimension_semantics<arbitrary>], iteration_bounds = array<i64: 1, 1, 1, 1>, scalar_prefetch = 0 : i64, scratch_operands = 0 : i64, tpu.core_type = #tpu.core_type<tc>, window_params = [{transform_indices = @transform_0, window_bounds = array<i64: 2, 128>}, {transform_indices = @transform_1, window_bounds = array<i64: 1, 128, 128>}, {transform_indices = @transform_2, window_bounds = array<i64: 1, 1, 128>}, {transform_indices = @transform_3, window_bounds = array<i64: 2, 128>}]} {
    %c0 = arith.constant 0 : index
    %c0_0 = arith.constant 0 : index
    %0 = vector.load %arg4[%c0, %c0_0] : memref<2x128xf32, #tpu.memory_space<vmem>>, vector<2x128xf32>
    %c0_1 = arith.constant 0 : index
    %c0_2 = arith.constant 0 : index
    %c0_3 = arith.constant 0 : index
    %1 = vector.load %arg5[%c0_1, %c0_2, %c0_3] : memref<1x128x128xf32, #tpu.memory_space<vmem>>, vector<1x128x128xf32>
    %2 = vector.shape_cast %1 : vector<1x128x128xf32> to vector<128x128xf32>
    %cst = arith.constant dense<0.000000e+00> : vector<2x128xf32>
    %3 = tpu.matmul %0, %2, %cst {dimension_numbers = #tpu.dot_dimension_numbers<[1], [0], [0], [1], [0, 0, 1, 1], [], []>} : vector<2x128xf32>, vector<128x128xf32>, vector<2x128xf32> -> vector<2x128xf32>
    %c0_4 = arith.constant 0 : index
    %c0_5 = arith.constant 0 : index
    %c0_6 = arith.constant 0 : index
    %4 = vector.load %arg6[%c0_4, %c0_5, %c0_6] : memref<1x1x128xf32, #tpu.memory_space<vmem>>, vector<1x1x128xf32>
    %5 = vector.shape_cast %4 : vector<1x1x128xf32> to vector<1x128xf32>
    %6 = vector.broadcast %5 : vector<1x128xf32> to vector<2x128xf32>
    %7 = arith.addf %3, %6 : vector<2x128xf32>
    %c0_7 = arith.constant 0 : index
    %c0_8 = arith.constant 0 : index
    %8 = vector.load %arg7[%c0_7, %c0_8] : memref<2x128xf32, #tpu.memory_space<vmem>>, vector<2x128xf32>
    tpu.vector_store %arg7[%c0_7, %c0_8], %7 {strides = array<i32>} : memref<2x128xf32, #tpu.memory_space<vmem>>, vector<2x128xf32>,
    return
  }
  func.func @transform_0(%arg0: i32, %arg1: i32, %arg2: i32, %arg3: i32) -> (i32, i32) {
    %c1_i32 = arith.constant 1 : i32
    %0 = arith.muli %arg0, %c1_i32 : i32
    %1 = arith.addi %0, %arg3 : i32
    %c0_i32 = arith.constant 0 : i32
    return %arg1, %1 : i32, i32
  }
  func.func @transform_1(%arg0: i32, %arg1: i32, %arg2: i32, %arg3: i32) -> (i32, i32, i32) {
    %c0_i32 = arith.constant 0 : i32
    return %arg0, %arg3, %arg2 : i32, i32, i32
  }
  func.func @transform_2(%arg0: i32, %arg1: i32, %arg2: i32, %arg3: i32) -> (i32, i32, i32) {
    %c0_i32 = arith.constant 0 : i32
    %c0_i32_0 = arith.constant 0 : i32
    return %arg0, %c0_i32, %arg2 : i32, i32, i32
  }
  func.func @transform_3(%arg0: i32, %arg1: i32, %arg2: i32, %arg3: i32) -> (i32, i32) {
    %c1_i32 = arith.constant 1 : i32
    %0 = arith.muli %arg0, %c1_i32 : i32
    %1 = arith.addi %0, %arg2 : i32
    %c0_i32 = arith.constant 0 : i32
    return %arg1, %1 : i32, i32
  }
}

</mosaic_0001>

<llo_original>
// kernel: tpu_custom_call.1
$region0: #{tpu_custom_call.1}
  #allocation0 [shape = 'u32[]', space=smem, size = 0x4, offset = 0x4, fixed_abs, tag = 'smem constant byte address 0x4 - core index']
  #allocation1 [shape = 'u32[144,128]{1,0:T(1,128)}', space=vmem, size = 0x12000, scoped, tag = 'internal scratch']
  %s0 = inlined_call_operand.hbm [shape: f32[2,128], index: 0, kind: input, shape index: {}]
  %s1 = inlined_call_operand.hbm [shape: f32[1,128,128], index: 1, kind: input, shape index: {}]
  %s2 = inlined_call_operand.vmem [shape: f32[1,1,128], index: 2, kind: input, shape index: {}]
  %s3 = inlined_call_operand.hbm [shape: f32[2,128], index: 3, kind: output, shape index: {}]
  %s4 = sld [smem:[#allocation0]]
  $region30: #{tpu_custom_call.1} parent=0
    _
  %s6 = ssub.s32 1, %s4
  %s7 = scalar_select 0, %s6, %s4
  $region1: #{tpu_custom_call.1} parent=0
    #allocation2 [shape = 'u8[1024]{0}', space=vmem, size = 0x400, scoped, tag = 'input window, operand 0, single buffered']
    #allocation3 [shape = 's32[1]{0}', space=sflag, size = 0x4, scoped, tag = 'scoped memory for tpu_custom_call.1']
    #allocation4 [shape = 's32[1]{0}', space=sflag, size = 0x4, scoped, tag = 'scoped memory for tpu_custom_call.1']
    #allocation5 [shape = 'u8[65536]{0}', space=vmem, size = 0x10000, scoped, tag = 'input window, operand 1, single buffered']
    #allocation6 [shape = 's32[1]{0}', space=sflag, size = 0x4, scoped, tag = 'scoped memory for tpu_custom_call.1']
    #allocation7 [shape = 'u8[1024]{0}', space=vmem, size = 0x400, scoped, tag = 'output window, operand 0, single buffered']
    %8 = vsyncpa [#allocation3], 0
    %9 = vsyncpa [#allocation6], 0
    %10 = vsyncpa [#allocation4], 0
    // Predicated region
    $region2: #{tpu_custom_call.1} parent=1 // pred_check
      _
    $region3: #{tpu_custom_call.1} parent=1 // pred_check_branch
      %12 = sbr.rel (0) target = $region5
    $region4: #{tpu_custom_call.1} parent=1 // pred_region
      %s13 = sadd.s32 0, 0
      %s15 = ssub.s32 32, 32
      %16 = vsyncadd [#allocation3], %s15
      %s17 = smul.addr %s13, 32
      %s18 = scalar_lea.hbm %s0, %s17
      %s20 = sshll.u32 [#allocation2], 4
      %s21 = int_to_ptr.vmem [resolvable:$true] %s20
      %23 = dma.hbm_to_vmem [thread:$0]  %s18, 32, %s21, [#allocation3]
    $region5: #{tpu_custom_call.1} parent=1 // pred_fallthru
      _
    // Predicated region
    $region6: #{tpu_custom_call.1} parent=1 // pred_check
      _
    $region7: #{tpu_custom_call.1} parent=1 // pred_check_branch
      %25 = sbr.rel (0) target = $region9
    $region8: #{tpu_custom_call.1} parent=1 // pred_region
      %s27 = ssub.s32 2048, 2048
      %28 = vsyncadd [#allocation6], %s27
      %s29 = sshll.u32 [#allocation5], 4
      %s30 = int_to_ptr.vmem [resolvable:$true] %s29
      %35 = dma.hbm_to_vmem [thread:$0]  %s1, 2048, %s30, [#allocation6], 128, 128, 8
    $region9: #{tpu_custom_call.1} parent=1 // pred_fallthru
      _
    // Predicated region
    $region10: #{tpu_custom_call.1} parent=1 // pred_check
      _
    $region11: #{tpu_custom_call.1} parent=1 // pred_check_branch
      %37 = sbr.rel (0) target = $region13
    $region12: #{tpu_custom_call.1} parent=1 // pred_region
      _
    $region13: #{tpu_custom_call.1} parent=1 // pred_fallthru
      _
    // Predicated region
    $region14: #{tpu_custom_call.1} parent=1 // pred_check
      _
    $region15: #{tpu_custom_call.1} parent=1 // pred_check_branch
      %39 = sbr.rel (0) target = $region17
    $region16: #{tpu_custom_call.1} parent=1 // pred_region
      %40 = dma.done [#allocation3], 32
    $region17: #{tpu_custom_call.1} parent=1 // pred_fallthru
      _
    // Predicated region
    $region18: #{tpu_custom_call.1} parent=1 // pred_check
      _
    $region19: #{tpu_custom_call.1} parent=1 // pred_check_branch
      %42 = sbr.rel (0) target = $region21
    $region20: #{tpu_custom_call.1} parent=1 // pred_region
      %43 = dma.done [#allocation6], 2048
    $region21: #{tpu_custom_call.1} parent=1 // pred_fallthru
      _
    %s44 = sadd.s32 0, 0
    %s45 = sadd.s32 0, 0
    %v46 = vld [vmem:[#allocation2] sm:$0x3]
    %v47 = vld [vmem:[#allocation5] sm:$0xff]
    %v48 = vld [vmem:[#allocation5 + $0x8] sm:$0xff]
    %v49 = vld [vmem:[#allocation5 + $0x10] sm:$0xff]
    %v50 = vld [vmem:[#allocation5 + $0x18] sm:$0xff]
    %v51 = vld [vmem:[#allocation5 + $0x20] sm:$0xff]
    %v52 = vld [vmem:[#allocation5 + $0x28] sm:$0xff]
    %v53 = vld [vmem:[#allocation5 + $0x30] sm:$0xff]
    %v54 = vld [vmem:[#allocation5 + $0x38] sm:$0xff]
    %v55 = vld [vmem:[#allocation5 + $0x40] sm:$0xff]
    %v56 = vld [vmem:[#allocation5 + $0x48] sm:$0xff]
    %v57 = vld [vmem:[#allocation5 + $0x50] sm:$0xff]
    %v58 = vld [vmem:[#allocation5 + $0x58] sm:$0xff]
    %v59 = vld [vmem:[#allocation5 + $0x60] sm:$0xff]
    %v60 = vld [vmem:[#allocation5 + $0x68] sm:$0xff]
    %v61 = vld [vmem:[#allocation5 + $0x70] sm:$0xff]
    %v62 = vld [vmem:[#allocation5 + $0x78] sm:$0xff]
    %v63 = vld [vmem:[%s2] sm:$0x1]
    %v65 = vlaneseq
    %v66 = vshrl.u32 %v65, 7
    %v67 = vsub.s32 0, %v66
    %v68 = vrot.slane %v63, %v67
    %70 = vmatprep.subr.mxu0 0.0
    %71 = vmatpush1.msra.mxu0 %v47
    %72 = vmatprep.subr.mxu0 0.0
    %73 = vmatpush1.msra.mxu0 %v48
    %74 = vmatprep.subr.mxu0 0.0
    %75 = vmatpush1.msra.mxu0 %v49
    %76 = vmatprep.subr.mxu0 0.0
    %77 = vmatpush1.msra.mxu0 %v50
    %78 = vmatprep.subr.mxu0 0.0
    %79 = vmatpush1.msra.mxu0 %v51
    %80 = vmatprep.subr.mxu0 0.0
    %81 = vmatpush1.msra.mxu0 %v52
    %82 = vmatprep.subr.mxu0 0.0
    %83 = vmatpush1.msra.mxu0 %v53
    %84 = vmatprep.subr.mxu0 0.0
    %85 = vmatpush1.msra.mxu0 %v54
    %86 = vmatprep.subr.mxu0 0.0
    %87 = vmatpush1.msra.mxu0 %v55
    %88 = vmatprep.subr.mxu0 0.0
    %89 = vmatpush1.msra.mxu0 %v56
    %90 = vmatprep.subr.mxu0 0.0
    %91 = vmatpush1.msra.mxu0 %v57
    %92 = vmatprep.subr.mxu0 0.0
    %93 = vmatpush1.msra.mxu0 %v58
    %94 = vmatprep.subr.mxu0 0.0
    %95 = vmatpush1.msra.mxu0 %v59
    %96 = vmatprep.subr.mxu0 0.0
    %97 = vmatpush1.msra.mxu0 %v60
    %98 = vmatprep.subr.mxu0 0.0
    %99 = vmatpush1.msra.mxu0 %v61
    %100 = vmatprep.subr.mxu0 0.0
    %101 = vmatpush1.msra.mxu0 %v62
    %102 = vmatprep.subr.mxu0 0.0
    %103 = vmatpush1.msra.mxu0 0.0
    %104 = vmatprep.subr.mxu0 0.0
    %105 = vmatpush1.msra.mxu0 0.0
    %106 = vmatprep.subr.mxu0 0.0
    %107 = vmatpush1.msra.mxu0 0.0
    %108 = vmatprep.subr.mxu0 0.0
    %109 = vmatpush1.msra.mxu0 0.0
    %110 = vmatprep.subr.mxu0 0.0
    %111 = vmatpush1.msra.mxu0 0.0
    %112 = vmatprep.subr.mxu0 0.0
    %113 = vmatpush1.msra.mxu0 0.0
    %114 = vmatprep.subr.mxu0 0.0
    %115 = vmatpush1.msra.mxu0 0.0
    %116 = vmatprep.subr.mxu0 0.0
    %117 = vmatpush1.msra.mxu0 0.0
    %118 = vmatprep.subr.mxu0 0.0
    %119 = vmatpush1.msra.mxu0 0.0
    %120 = vmatprep.subr.mxu0 0.0
    %121 = vmatpush1.msra.mxu0 0.0
    %122 = vmatprep.subr.mxu0 0.0
    %123 = vmatpush1.msra.mxu0 0.0
    %124 = vmatprep.subr.mxu0 0.0
    %125 = vmatpush1.msra.mxu0 0.0
    %126 = vmatprep.subr.mxu0 0.0
    %127 = vmatpush1.msra.mxu0 0.0
    %128 = vmatprep.subr.mxu0 0.0
    %129 = vmatpush1.msra.mxu0 0.0
    %130 = vmatprep.subr.mxu0 0.0
    %131 = vmatpush1.msra.mxu0 0.0
    %132 = vmatprep.subr.mxu0 0.0
    %133 = vmatpush1.msra.mxu0 0.0
    %134 = vmatprep.mubr.f32.mxu0 0.0
    %135 = vmatmul.mubr.f32.gmra.mrb[0].mxu0 %v46
    %v136 = vpop.f32.mrb[0].mxu0
    %v137 = vadd.f32 %v68, %v136
    %v138 = vpop.f32.mrb[0].mxu0
    %139 = vdwg.mxu0
    %140 = vst [vmem:[#allocation7] sm:$0x3] %v137
    // Predicated region
    $region22: #{tpu_custom_call.1} parent=1 // pred_check
      _
    $region23: #{tpu_custom_call.1} parent=1 // pred_check_branch
      %142 = sbr.rel (0) target = $region25
    $region24: #{tpu_custom_call.1} parent=1 // pred_region
      %s143 = sadd.s32 0, 0
      %s145 = ssub.s32 32, 32
      %146 = vsyncadd [#allocation4], %s145
      %s147 = smul.addr %s143, 32
      %s148 = scalar_lea.hbm %s3, %s147
      %s150 = sshll.u32 [#allocation7], 4
      %s151 = int_to_ptr.vmem [resolvable:$true] %s150
      %153 = dma.vmem_to_hbm [thread:$0]  %s151, 32, %s148, [#allocation4]
    $region25: #{tpu_custom_call.1} parent=1 // pred_fallthru
      _
    // Predicated region
    $region26: #{tpu_custom_call.1} parent=1 // pred_check
      _
    $region27: #{tpu_custom_call.1} parent=1 // pred_check_branch
      %155 = sbr.rel (0) target = $region29
    $region28: #{tpu_custom_call.1} parent=1 // pred_region
      %156 = dma.done [#allocation4], 32
    $region29: #{tpu_custom_call.1} parent=1 // pred_fallthru
      _
    %157 = vsyncpa [#allocation3], 1
    %158 = vsyncpa [#allocation6], 1
    %159 = vsyncpa [#allocation4], 1

</llo_original>
